<compile_context>
chip_gen: v7x
topology: tpu7x:2x2x1
jax: 0.10.0
libtpu: 0.0.40
codegen_flags: <defaults>
</compile_context>

<pallas_src>
import functools

import jax
import jax.numpy as jnp
from jax import lax
from jax.experimental import pallas as pl
from jax.experimental.pallas import tpu as pltpu

_EPS = 1e-5  # nn.BatchNorm3d default eps


def _vmem_capacity_bytes():
    """Physical VMEM per TensorCore (128 MiB v5e/v6e, 64 MiB v7x)."""
    try:
        return int(pltpu.get_tpu_info().vmem_capacity_bytes)
    except Exception:
        return 64 * 1024 * 1024  # conservative (v7x-sized) fallback


# ---------------------------------------------------------------------------
# Whole-rep-resident single-pass path.
# ---------------------------------------------------------------------------
def _gbn_whole_rep_kernel(x_ref, o_ref):
    """One grid step == one rep channel; block = (B, 1, R, L)."""
    lanes = x_ref.shape[3]
    # Shifted-variance pivot (mean of the first row): guards against
    # catastrophic cancellation in E[x^2] - E[x]^2 when |mean| >> std.
    pivot = jnp.sum(x_ref[:1, :1, :1, :].astype(jnp.float32)) * (1.0 / lanes)
    d = x_ref[...].astype(jnp.float32) - pivot          # single f32 temporary
    inv_n = 1.0 / float(d.size)
    mean_d = jnp.sum(d) * inv_n
    var = jnp.maximum(jnp.sum(d * d) * inv_n - mean_d * mean_d, 0.0)
    scale = lax.rsqrt(var + _EPS)
    # (x - mean) * scale == d*scale - mean_d*scale; f32 epilogue, one cast at
    # the store (v5e has no bf16 VALU; the kernel is HBM-bound anyway).
    o_ref[...] = (d * scale - mean_d * scale).astype(o_ref.dtype)


def _pick_whole_rep_tail(K, dim_rep, hw):
    """Free reshape of a rep slab to (R, L): lane-dense / sublane-dense."""
    if K % 1024 == 0:
        return (8, K // 8)            # wide unmasked lanes, dense sublanes
    if K % 128 == 0:
        return (K // 128, 128)        # lane-dense, 128-wide rows
    # K not a multiple of 128: prefer sublane-dense rows (R % 8 == 0) with the
    # widest lane dim available; lanes remain partially masked (padding the
    # array would cost an extra HBM copy on a mem-bound kernel).
    r = 8
    while r <= min(K, 4096):
        if K % r == 0:
            return (r, K // r)
        r += 8
    return (dim_rep, hw)


# ---------------------------------------------------------------------------
# Tiled two-call path (stats pass + normalize pass).
# ---------------------------------------------------------------------------
def _pick_tile(K, batch, itemsize, target_block_bytes):
    """Choose (lane_width, rows_per_rep, tile_rows, group_rows).

    Prefers sublane-aligned tile rows (multiples of 8 -> VALU-only partial
    accumulation), then the largest block under target_block_bytes, then the
    widest lane dim (wide unmasked vst).
    """
    best = None
    for lw in (1024, 512, 256, 128):
        if K % lw:
            continue
        p = K // lw
        cap_rows = max(1, target_block_bytes // (batch * lw * itemsize))
        tr = 0
        d = 8
        while d <= min(p, cap_rows):
            if p % d == 0:
                tr = d
            d += 8
        if tr == 0:
            # No sublane-aligned divisor under the cap; the only lane-legal
            # fallback is the full row count (block == full trailing dims).
            if batch * p * lw * itemsize <= max(target_block_bytes, 10 << 20):
                tr = p
            else:
                continue
        gr = 8 if tr % 8 == 0 else 1
        blk = batch * tr * lw * itemsize
        score = (gr, min(blk, target_block_bytes),
                 -max(0, blk - target_block_bytes), lw)
        if best is None or score > best[0]:
            best = (score, lw, p, tr, gr)
    if best is None:
        return None
    return best[1], best[2], best[3], best[4]


def _gbn_stats_kernel(x_ref, s_ref, *, group_rows):
    """grid=(num_rep, n_tiles); x block=(B,1,TR,LW), stats block=(1,2,GR,LW).

    The stats block is pinned per rep (VMEM-resident accumulator).  When
    TR % 8 == 0 the per-tile partials stay element-wise on the VALU; the single
    cross-lane reduce is deferred to the normalize kernel.
    """
    t = pl.program_id(1)

    @pl.when(t == 0)
    def _init():
        s_ref[...] = jnp.zeros_like(s_ref)

    xf = x_ref[...].astype(jnp.float32)
    b, _, tr, lw = xf.shape
    if group_rows == 8:
        g = xf.reshape(b, tr // 8, 8, lw)      # layout-preserving (tr % 8 == 0)
        s_ref[0, 0] = s_ref[0, 0] + jnp.sum(g, axis=(0, 1))
        s_ref[0, 1] = s_ref[0, 1] + jnp.sum(g * g, axis=(0, 1))
    else:
        # Degraded-shape fallback: per-lane partials (sublane reduce on XLU).
        s_ref[0, 0] = s_ref[0, 0] + jnp.sum(xf, axis=(0, 1, 2))[None, :]
        s_ref[0, 1] = s_ref[0, 1] + jnp.sum(xf * xf, axis=(0, 1, 2))[None, :]


def _gbn_normalize_kernel(s_ref, x_ref, o_ref, *, inv_n):
    """grid=(num_rep, n_tiles); per-tile x*scale + shift from per-rep stats."""
    s = s_ref[...]                              # (1, 2, GR, LW) f32 partials
    total = jnp.sum(s[0, 0])
    total_sq = jnp.sum(s[0, 1])
    mean = total * inv_n
    # TODO(synk): tiled stats use unshifted E[x^2]-E[x]^2 (f32, clamped);
    # a cross-tile pivot would need an extra stats round-trip.
    var = jnp.maximum(total_sq * inv_n - mean * mean, 0.0)
    scale = lax.rsqrt(var + _EPS)
    shift = -mean * scale
    o_ref[...] = (x_ref[...].astype(jnp.float32) * scale + shift).astype(o_ref.dtype)


# ---------------------------------------------------------------------------
# Wrapper.
# ---------------------------------------------------------------------------
def group_batch_norm(x, num_rep, dim_rep, *, force_tiled=False,
                     target_block_bytes=None):
    """Forward of GroupBatchNorm (training mode, affine=False).

    x: (B, C, H, W) with C == num_rep * dim_rep (NCHW, matching PyTorch).
    """
    B, C, H, W = x.shape
    assert C == num_rep * dim_rep, "C must equal num_rep * dim_rep"
    K = dim_rep * H * W                        # elements per (batch, rep)
    itemsize = jnp.dtype(x.dtype).itemsize
    slab_bytes = B * K * itemsize              # one rep's data
    cap = _vmem_capacity_bytes()

    # Whole-rep footprint: in + out double-buffered plus in-kernel f32 temps.
    est_whole = 4 * slab_bytes + 2 * B * K * 4
    mono_budget = min(96 << 20, int(cap * 0.72))   # ~92 MiB v5e/v6e, ~46 MiB v7x

    use_tiled = force_tiled or est_whole > mono_budget
    # With very few reps, grid=(num_rep,) gives the pipeline nothing to overlap
    # (and idles a v7x TensorCore); prefer the tiled path for big slabs.
    if not use_tiled and num_rep < 4 and slab_bytes > (2 << 20):
        use_tiled = True

    tile = None
    if use_tiled:
        if target_block_bytes is None:
            target_block_bytes = (8 << 20) if cap >= (96 << 20) else (6 << 20)
        if K % 128 == 0:
            tile = _pick_tile(K, B, itemsize, target_block_bytes)
        if tile is None:
            # TODO(synk): non-lane-aligned / awkward K would need masked tiles;
            # fall back to the single-pass path (correct, possibly VMEM-heavy).
            use_tiled = False

    if not use_tiled:
        # ---- whole-rep-resident single-pass path -------------------------
        tail = _pick_whole_rep_tail(K, dim_rep, H * W)
        xk = x.reshape(B, num_rep, *tail)
        blk = (B, 1) + tail
        hi = max(32 << 20, min(112 << 20, cap - (16 << 20)))
        vmem_limit = int(min(max(est_whole + (8 << 20), 32 << 20), hi))
        out = pl.pallas_call(
            _gbn_whole_rep_kernel,
            out_shape=jax.ShapeDtypeStruct(xk.shape, x.dtype),
            grid_spec=pltpu.PrefetchScalarGridSpec(
                num_scalar_prefetch=0,
                grid=(num_rep,),
                in_specs=[pl.BlockSpec(blk, lambda r: (0, r, 0, 0))],
                out_specs=pl.BlockSpec(blk, lambda r: (0, r, 0, 0)),
            ),
            compiler_params=pltpu.CompilerParams(
                dimension_semantics=("parallel",),
                vmem_limit_bytes=vmem_limit,
            ),
        )(xk)
    else:
        # ---- tiled two-call path (stats pass, then normalize pass) -------
        lw, P, tr, gr = tile
        n_tiles = P // tr
        xk = x.reshape(B, num_rep, P, lw)
        x_blk = (B, 1, tr, lw)
        s_shape = (num_rep, 2, gr, lw)
        s_blk = (1, 2, gr, lw)
        block_bytes = B * tr * lw * itemsize
        stats_limit = int(min(max(2 * block_bytes + (8 << 20), 32 << 20), 48 << 20))
        norm_limit = int(min(max(4 * block_bytes + (8 << 20), 32 << 20), 48 << 20))

        stats = pl.pallas_call(
            functools.partial(_gbn_stats_kernel, group_rows=gr),
            out_shape=jax.ShapeDtypeStruct(s_shape, jnp.float32),
            grid_spec=pltpu.PrefetchScalarGridSpec(
                num_scalar_prefetch=0,
                grid=(num_rep, n_tiles),
                in_specs=[pl.BlockSpec(x_blk, lambda r, t: (0, r, t, 0))],
                out_specs=pl.BlockSpec(s_blk, lambda r, t: (r, 0, 0, 0)),
            ),
            compiler_params=pltpu.CompilerParams(
                # rep axis across megacore TCs; tile axis carries the resident
                # accumulator dependency -> "arbitrary".
                dimension_semantics=("parallel", "arbitrary"),
                vmem_limit_bytes=stats_limit,
            ),
        )(xk)

        out = pl.pallas_call(
            functools.partial(_gbn_normalize_kernel, inv_n=1.0 / float(B * K)),
            out_shape=jax.ShapeDtypeStruct(xk.shape, x.dtype),
            grid_spec=pltpu.PrefetchScalarGridSpec(
                num_scalar_prefetch=0,
                grid=(num_rep, n_tiles),
                in_specs=[
                    pl.BlockSpec(s_blk, lambda r, t: (r, 0, 0, 0)),
                    pl.BlockSpec(x_blk, lambda r, t: (0, r, t, 0)),
                ],
                out_specs=pl.BlockSpec(x_blk, lambda r, t: (0, r, t, 0)),
            ),
            compiler_params=pltpu.CompilerParams(
                # No cross-step dependencies: both axes parallel (keeps both
                # v7x TensorCores busy even for small num_rep).
                dimension_semantics=("parallel", "parallel"),
                vmem_limit_bytes=norm_limit,
            ),
        )(stats, xk)

    # Free reshape back to NCHW.
    return out.reshape(B, C, H, W)


def _reference(x, num_rep, dim_rep):
    B, C, H, W = x.shape
    x5 = x.reshape(B, num_rep, dim_rep, H, W).astype(jnp.float32)
    mean = jnp.mean(x5, axis=(0, 2, 3, 4), keepdims=True)
    var = jnp.mean((x5 - mean) ** 2, axis=(0, 2, 3, 4), keepdims=True)
    y = (x5 - mean) * lax.rsqrt(var + _EPS)
    return y.reshape(B, C, H, W)


if __name__ == "__main__":
    # Module config (affine=False -> no learnable parameters to initialize).
    num_rep, dim_rep = 4, 4
    B, H, W = 2, 16, 16
    C = num_rep * dim_rep

    key = jax.random.PRNGKey(0)
    x = jax.random.normal(key, (B, C, H, W), dtype=jnp.float32) * 2.0 + 0.5

    # 1) Whole-rep-resident single-pass path, f32.
    y = jax.block_until_ready(group_batch_norm(x, num_rep, dim_rep))
    y_ref = _reference(x, num_rep, dim_rep)
    assert y.shape == x.shape and y.dtype == x.dtype
    assert jnp.allclose(y.astype(jnp.float32), y_ref, atol=1e-4, rtol=1e-4)

    # 2) Tiled two-call path: multi-tile VALU-partial accumulation.
    H2 = W2 = 32
    x2 = jax.random.normal(jax.random.PRNGKey(1), (B, C, H2, W2), dtype=jnp.float32)
    y2 = jax.block_until_ready(group_batch_norm(
        x2, num_rep, dim_rep, force_tiled=True, target_block_bytes=16 << 10))
    y2_ref = _reference(x2, num_rep, dim_rep)
    assert y2.shape == x2.shape and y2.dtype == x2.dtype
    assert jnp.allclose(y2.astype(jnp.float32), y2_ref, atol=1e-4, rtol=1e-4)

    # 3) Tiled path, per-lane (group_rows=1) fallback for awkward row counts.
    x3 = jax.random.normal(jax.random.PRNGKey(2), (2, 6, 16, 8), dtype=jnp.float32)
    y3 = jax.block_until_ready(group_batch_norm(x3, 2, 3, force_tiled=True))
    y3_ref = _reference(x3, 2, 3)
    assert y3.shape == x3.shape and y3.dtype == x3.dtype
    assert jnp.allclose(y3.astype(jnp.float32), y3_ref, atol=1e-4, rtol=1e-4)

    # 4) bf16 input: stats + epilogue in f32, single cast at the store.
    xb = x.astype(jnp.bfloat16)
    yb = jax.block_until_ready(group_batch_norm(xb, num_rep, dim_rep))
    yb_ref = _reference(xb.astype(jnp.float32), num_rep, dim_rep)
    assert yb.dtype == jnp.bfloat16
    assert jnp.allclose(yb.astype(jnp.float32), yb_ref, atol=0.1, rtol=0.05)

    print("KERNEL_OK")
</pallas_src>

<mosaic_0001>
module attributes {stable_mosaic.version = 11 : i64} {
  func.func @_gbn_whole_rep_kernel(%arg0: i32, %arg1: memref<2x1x8x128xf32, #tpu.memory_space<vmem>>, %arg2: memref<2x1x8x128xf32, #tpu.memory_space<vmem>>) attributes {dimension_semantics = [#tpu.dimension_semantics<parallel>], iteration_bounds = array<i64: 4>, scalar_prefetch = 0 : i64, scratch_operands = 0 : i64, tpu.core_type = #tpu.core_type<tc>, window_params = [{transform_indices = @transform_0, window_bounds = array<i64: 2, 1, 8, 128>}, {transform_indices = @transform_1, window_bounds = array<i64: 2, 1, 8, 128>}]} {
    %c0 = arith.constant 0 : index
    %c0_0 = arith.constant 0 : index
    %c0_1 = arith.constant 0 : index
    %c0_2 = arith.constant 0 : index
    %0 = vector.load %arg1[%c0, %c0_0, %c0_1, %c0_2] : memref<2x1x8x128xf32, #tpu.memory_space<vmem>>, vector<1x1x1x128xf32>
    %1 = vector.shape_cast %0 : vector<1x1x1x128xf32> to vector<1x1x1x1x128xf32>
    %cst = arith.constant dense<0.000000e+00> : vector<1xf32>
    %2 = vector.multi_reduction <add>, %1, %cst [1, 2, 3, 4] : vector<1x1x1x1x128xf32> to vector<1xf32>
    %3 = vector.shape_cast %2 : vector<1xf32> to vector<1x1x1x1x1xf32>
    %4 = vector.extract %3[0, 0, 0, 0, 0] : f32 from vector<1x1x1x1x1xf32>
    %cst_3 = arith.constant 7.812500e-03 : f32
    %5 = arith.mulf %4, %cst_3 : f32
    %c0_4 = arith.constant 0 : index
    %c0_5 = arith.constant 0 : index
    %c0_6 = arith.constant 0 : index
    %c0_7 = arith.constant 0 : index
    %6 = vector.load %arg1[%c0_4, %c0_5, %c0_6, %c0_7] : memref<2x1x8x128xf32, #tpu.memory_space<vmem>>, vector<2x1x8x128xf32>
    %7 = vector.broadcast %5 : f32 to vector<2x1x8x128xf32>
    %8 = arith.subf %6, %7 : vector<2x1x8x128xf32>
    %9 = vector.shape_cast %8 : vector<2x1x8x128xf32> to vector<1x2x1x8x128xf32>
    %cst_8 = arith.constant dense<0.000000e+00> : vector<1xf32>
    %10 = vector.multi_reduction <add>, %9, %cst_8 [1, 2, 3, 4] : vector<1x2x1x8x128xf32> to vector<1xf32>
    %11 = vector.shape_cast %10 : vector<1xf32> to vector<1x1x1x1x1xf32>
    %12 = vector.extract %11[0, 0, 0, 0, 0] : f32 from vector<1x1x1x1x1xf32>
    %cst_9 = arith.constant 4.8828125E-4 : f32
    %13 = arith.mulf %12, %cst_9 : f32
    %14 = arith.mulf %8, %8 : vector<2x1x8x128xf32>
    %15 = vector.shape_cast %14 : vector<2x1x8x128xf32> to vector<1x2x1x8x128xf32>
    %cst_10 = arith.constant dense<0.000000e+00> : vector<1xf32>
    %16 = vector.multi_reduction <add>, %15, %cst_10 [1, 2, 3, 4] : vector<1x2x1x8x128xf32> to vector<1xf32>
    %17 = vector.shape_cast %16 : vector<1xf32> to vector<1x1x1x1x1xf32>
    %18 = vector.extract %17[0, 0, 0, 0, 0] : f32 from vector<1x1x1x1x1xf32>
    %cst_11 = arith.constant 4.8828125E-4 : f32
    %19 = arith.mulf %18, %cst_11 : f32
    %20 = arith.mulf %13, %13 : f32
    %21 = arith.subf %19, %20 : f32
    %cst_12 = arith.constant 0.000000e+00 : f32
    %22 = arith.maximumf %21, %cst_12 : f32
    %cst_13 = arith.constant 9.99999974E-6 : f32
    %23 = arith.addf %22, %cst_13 : f32
    %24 = math.rsqrt %23 : f32
    %25 = vector.broadcast %24 : f32 to vector<2x1x8x128xf32>
    %26 = arith.mulf %8, %25 : vector<2x1x8x128xf32>
    %27 = arith.mulf %13, %24 : f32
    %28 = vector.broadcast %27 : f32 to vector<2x1x8x128xf32>
    %29 = arith.subf %26, %28 : vector<2x1x8x128xf32>
    %c0_14 = arith.constant 0 : index
    %c0_15 = arith.constant 0 : index
    %c0_16 = arith.constant 0 : index
    %c0_17 = arith.constant 0 : index
    %30 = vector.load %arg2[%c0_14, %c0_15, %c0_16, %c0_17] : memref<2x1x8x128xf32, #tpu.memory_space<vmem>>, vector<2x1x8x128xf32>
    tpu.vector_store %arg2[%c0_14, %c0_15, %c0_16, %c0_17], %29 {strides = array<i32>} : memref<2x1x8x128xf32, #tpu.memory_space<vmem>>, vector<2x1x8x128xf32>,
    return
  }
  func.func @transform_0(%arg0: i32) -> (i32, i32, i32, i32) {
    %c0_i32 = arith.constant 0 : i32
    %c0_i32_0 = arith.constant 0 : i32
    %c0_i32_1 = arith.constant 0 : i32
    %c0_i32_2 = arith.constant 0 : i32
    return %c0_i32, %arg0, %c0_i32_0, %c0_i32_1 : i32, i32, i32, i32
  }
  func.func @transform_1(%arg0: i32) -> (i32, i32, i32, i32) {
    %c0_i32 = arith.constant 0 : i32
    %c0_i32_0 = arith.constant 0 : i32
    %c0_i32_1 = arith.constant 0 : i32
    %c0_i32_2 = arith.constant 0 : i32
    return %c0_i32, %arg0, %c0_i32_0, %c0_i32_1 : i32, i32, i32, i32
  }
}

</mosaic_0001>

<llo_original>
// kernel: tpu_custom_call.1
$region0: #{tpu_custom_call.1}
  #allocation0 [shape = 'u32[]', space=smem, size = 0x4, offset = 0x4, fixed_abs, tag = 'smem constant byte address 0x4 - core index']
  #allocation1 [shape = 'u32[144,128]{1,0:T(1,128)}', space=vmem, size = 0x12000, scoped, tag = 'internal scratch']
  %s0 = inlined_call_operand.hbm [shape: f32[2,4,8,128], index: 0, kind: input, shape index: {}]
  %s1 = inlined_call_operand.hbm [shape: f32[2,4,8,128], index: 1, kind: output, shape index: {}]
  %s2 = sld [smem:[#allocation0]]
  $region41: #{tpu_custom_call.1} parent=0
    _
  %s4 = ssub.s32 1, %s2
  %s5 = scalar_select 0, %s4, %s2
  $region1: #{tpu_custom_call.1} parent=0
    #allocation2 [shape = 'u8[16384]{0}', space=vmem, size = 0x4000, scoped, tag = 'input window, operand 0']
    #allocation3 [shape = 's32[2]{0}', space=sflag, size = 0x8, scoped, tag = 'scoped memory for tpu_custom_call.1']
    #allocation4 [shape = 's32[2]{0}', space=sflag, size = 0x8, scoped, tag = 'scoped memory for tpu_custom_call.1']
    #allocation5 [shape = 'u8[16384]{0}', space=vmem, size = 0x4000, scoped, tag = 'output window, operand 0']
    %6 = vsyncpa [#allocation3], 0
    %s7 = scalar_lea.sflag [#allocation3], 1
    %8 = vsyncpa %s7, 0
    %9 = vsyncpa [#allocation4], 0
    %s10 = scalar_lea.sflag [#allocation4], 1
    %11 = vsyncpa %s10, 0
    loop: start=0, step=1, limit=6
    $region2: #{tpu_custom_call.1} parent=1 // loop_pre_header
      _
    $region3: #{tpu_custom_call.1} parent=1 // loop_header
      %s13 = sphi 0, %s17
      %p14 = scmp.ge.s32.totalorder %s13, 6
      %s23 = sphi 0, %s25
      %s26 = sphi 0, %s23
      %s27 = sphi 0, %s26
      %s43 = sphi 0, %s27
      %s49 = sphi 0, %s51
      %s52 = sphi 0, %s49
      %s53 = sphi 0, %s52
      %s69 = sphi 0, %s53
    $region4: #{tpu_custom_call.1} parent=1 // loop_header_branch
      %16 = sbr.rel (%p14) target = $region8
    $region5: #{tpu_custom_call.1} parent=1 // loop_body
      %s18 = ssub.s32 %s13, 1
      %s19 = ssub.s32 %s13, 2
      %s20 = sadd.s32 %s13, 1
      %s21 = ssub.s32 %s13, %s20
      %p22 = scmp.eq.s32.totalorder %s21, 0
      %s24 = sadd.s32 %s23, 1
      %s25 = scalar_select %p22, %s23, %s24
      %p28 = pneg %p22
      %p29 = scmp.eq.s32.totalorder %s13, 3
      %p30 = por %p28, %p29
      %p31 = scmp.ne.s32.totalorder %s23, %s26
      %p32 = scmp.eq.s32.totalorder %s13, 0
      %p33 = por %p31, %p32
      %p34 = scmp.ne.s32.totalorder %s23, %s26
      %p35 = scmp.eq.s32.totalorder %s18, 3
      %p36 = por %p34, %p35
      %p37 = scmp.ne.s32.totalorder %s26, %s27
      %p38 = scmp.eq.s32.totalorder %s18, 0
      %p39 = por %p37, %p38
      %p40 = scmp.ne.s32.totalorder %s26, %s27
      %p41 = scmp.eq.s32.totalorder %s19, 3
      %p42 = por %p40, %p41
      %p44 = scmp.ne.s32.totalorder %s27, %s43
      %p45 = scmp.eq.s32.totalorder %s19, 0
      %p46 = por %p44, %p45
      %s47 = ssub.s32 %s13, %s20
      %p48 = scmp.eq.s32.totalorder %s47, 0
      %s50 = sadd.s32 %s49, 1
      %s51 = scalar_select %p48, %s49, %s50
      %p54 = pneg %p48
      %p55 = scmp.eq.s32.totalorder %s13, 3
      %p56 = por %p54, %p55
      %p57 = scmp.ne.s32.totalorder %s49, %s52
      %p58 = scmp.eq.s32.totalorder %s13, 0
      %p59 = por %p57, %p58
      %p60 = scmp.ne.s32.totalorder %s49, %s52
      %p61 = scmp.eq.s32.totalorder %s18, 3
      %p62 = por %p60, %p61
      %p63 = scmp.ne.s32.totalorder %s52, %s53
      %p64 = scmp.eq.s32.totalorder %s18, 0
      %p65 = por %p63, %p64
      %p66 = scmp.ne.s32.totalorder %s52, %s53
      %p67 = scmp.eq.s32.totalorder %s19, 3
      %p68 = por %p66, %p67
      %p70 = scmp.ne.s32.totalorder %s53, %s69
      %p71 = scmp.eq.s32.totalorder %s19, 0
      %p72 = por %p70, %p71
      %p73 = scmp.le.s32.totalorder 1, %s13
      %p74 = scmp.lt.s32.totalorder %s13, 5
      %p75 = pnand %p73, %p74
      %p76 = pneg %p75
      // Predicated region
      $region9: #{tpu_custom_call.1} parent=5 // pred_check
        _
      $region10: #{tpu_custom_call.1} parent=5 // pred_check_branch
        %78 = sbr.rel (%p75) target = $region12
      $region11: #{tpu_custom_call.1} parent=5 // pred_region
        %s79 = ssub.s32 %s13, 1
      $region12: #{tpu_custom_call.1} parent=5 // pred_fallthru
        _
      %p80 = scmp.lt.s32.totalorder %s13, 4
      // Predicated region
      $region13: #{tpu_custom_call.1} parent=5 // pred_check
        %p81 = pneg %p80
      $region14: #{tpu_custom_call.1} parent=5 // pred_check_branch
        %83 = sbr.rel (%p81) target = $region16
      $region15: #{tpu_custom_call.1} parent=5 // pred_region
        // Predicated region
        $region17: #{tpu_custom_call.1} parent=15 // pred_check
          %p84 = pneg %p33
        $region18: #{tpu_custom_call.1} parent=15 // pred_check_branch
          %86 = sbr.rel (%p84) target = $region20
        $region19: #{tpu_custom_call.1} parent=15 // pred_region
          %s87 = sand.u32 %s23, 1
          %s88 = scalar_lea.sflag [#allocation3], %s87
          %s89 = sand.u32 %s23, 1
          %s90 = smul.addr %s89, 16
          %s91 = scalar_lea.vmem [#allocation2], %s90
          %s93 = ssub.s32 256, 256
          %94 = vsyncadd %s88, %s93
          %s95 = smul.addr %s13, 128
          %s96 = scalar_lea.hbm %s0, %s95
          %s97 = sshll.u32 %s91, 4
          %s98 = int_to_ptr.vmem [resolvable:$true] %s97
          %103 = dma.hbm_to_vmem [thread:$0]  %s96, 256, %s98, %s88, 512, 128, 8
        $region20: #{tpu_custom_call.1} parent=15 // pred_fallthru
          _
      $region16: #{tpu_custom_call.1} parent=5 // pred_fallthru
        _
      %p104 = scmp.le.s32.totalorder 1, %s13
      %p105 = scmp.lt.s32.totalorder %s13, 5
      %p106 = pnand %p104, %p105
      %p107 = pneg %p106
      // Predicated region
      $region21: #{tpu_custom_call.1} parent=5 // pred_check
        _
      $region22: #{tpu_custom_call.1} parent=5 // pred_check_branch
        %109 = sbr.rel (%p106) target = $region24
      $region23: #{tpu_custom_call.1} parent=5 // pred_region
        %s110 = ssub.s32 %s13, 1
        %s111 = sand.u32 %s26, 1
        %s112 = scalar_lea.sflag [#allocation3], %s111
        %s113 = sand.u32 %s26, 1
        %s114 = smul.addr %s113, 16
        %s115 = scalar_lea.vmem [#allocation2], %s114
        // Predicated region
        $region25: #{tpu_custom_call.1} parent=23 // pred_check
          %p116 = pneg %p39
        $region26: #{tpu_custom_call.1} parent=23 // pred_check_branch
          %118 = sbr.rel (%p116) target = $region28
        $region27: #{tpu_custom_call.1} parent=23 // pred_region
          %119 = dma.done %s112, 256
        $region28: #{tpu_custom_call.1} parent=23 // pred_fallthru
          _
        %s120 = sand.u32 %s26, 1
        %s121 = scalar_lea.sflag [#allocation3], %s120
        %s122 = sand.u32 %s26, 1
        %s123 = smul.addr %s122, 16
        %s124 = scalar_lea.vmem [#allocation2], %s123
        %p125 = pneg %p39
        %p126 = pneg %p36
        %p127 = pneg %p65
        %p128 = pneg %p62
        %s129 = sand.u32 %s52, 1
        %s130 = scalar_lea.sflag [#allocation4], %s129
        %s131 = sand.u32 %s52, 1
        %s132 = smul.addr %s131, 16
        %s133 = scalar_lea.vmem [#allocation5], %s132
        %v134 = vld [vmem:[%s115] sm:$0x1]
        %vm135 = vcmask 1040384
        %v136 = vsel %vm135, %v134, 0.0
        %137 = vadd.xlane.f32.xlu0 %v136
        %v138 = vpop.xlane.xlu0 %137
        %v139 = vrot.slane %v138, 4
        %v140 = vadd.f32 %v138, %v139
        %v141 = vrot.slane %v140, 2
        %v142 = vadd.f32 %v140, %v141
        %v143 = vrot.slane %v142, 1
        %v144 = vadd.f32 %v142, %v143
        %s145 = vtos %v144
        %s146 = smul.f32 %s145, 0.0078125
        %v147 = vld [vmem:[%s115] sm:$0xff]
        %v148 = vld [vmem:[%s115 + $0x8] sm:$0xff]
        %v149 = vstv %s146
        %v150 = vsub.f32 %v147, %v149
        %v151 = vsub.f32 %v148, %v149
        %v152 = vadd.f32 %v150, %v151
        %153 = vadd.xlane.f32.xlu0 %v152
        %v154 = vpop.xlane.xlu0 %153
        %v155 = vrot.slane %v154, 4
        %v156 = vadd.f32 %v154, %v155
        %v157 = vrot.slane %v156, 2
        %v158 = vadd.f32 %v156, %v157
        %v159 = vrot.slane %v158, 1
        %v160 = vadd.f32 %v158, %v159
        %s161 = vtos %v160
        %s162 = smul.f32 %s161, 0.00048828125
        %v163 = vmul.f32 %v150, %v150
        %v164 = vmul.f32 %v151, %v151
        %v165 = vadd.f32 %v163, %v164
        %166 = vadd.xlane.f32.xlu0 %v165
        %v167 = vpop.xlane.xlu0 %166
        %v168 = vrot.slane %v167, 4
        %v169 = vadd.f32 %v167, %v168
        %v170 = vrot.slane %v169, 2
        %v171 = vadd.f32 %v169, %v170
        %v172 = vrot.slane %v171, 1
        %v173 = vadd.f32 %v171, %v172
        %s174 = vtos %v173
        %s175 = smul.f32 %s174, 0.00048828125
        %s176 = smul.f32 %s162, %s162
        %s177 = ssub.f32 %s175, %s176
        %s178 = smax.f32 %s177, 0.0
        %s179 = sadd.f32 %s178, 1e-05
        %v180 = vstv %s179
        %v181 = vrsqrt.pop %v180
        %s182 = vtos %v181
        %v183 = vstv %s182
        %v184 = vmul.f32 %v150, %v183
        %v185 = vmul.f32 %v151, %v183
        %s186 = smul.f32 %s162, %s182
        %v187 = vstv %s186
        %v188 = vsub.f32 %v184, %v187
        %v189 = vsub.f32 %v185, %v187
        %190 = vst [vmem:[%s133] sm:$0xff] %v188
        %191 = vst [vmem:[%s133 + $0x8] sm:$0xff] %v189
        %s192 = sand.u32 %s52, 1
        %s193 = scalar_lea.sflag [#allocation4], %s192
        %s194 = sand.u32 %s52, 1
        %s195 = smul.addr %s194, 16
        %s196 = scalar_lea.vmem [#allocation5], %s195
        // Predicated region
        $region29: #{tpu_custom_call.1} parent=23 // pred_check
          %p197 = pneg %p62
        $region30: #{tpu_custom_call.1} parent=23 // pred_check_branch
          %199 = sbr.rel (%p197) target = $region32
        $region31: #{tpu_custom_call.1} parent=23 // pred_region
          %s201 = ssub.s32 256, 256
          %202 = vsyncadd %s193, %s201
          %s203 = smul.addr %s18, 128
          %s204 = scalar_lea.hbm %s1, %s203
          %s205 = sshll.u32 %s196, 4
          %s206 = int_to_ptr.vmem [resolvable:$true] %s205
          %211 = dma.vmem_to_hbm [thread:$0]  %s206, 256, %s204, %s193, 128, 512, 8
        $region32: #{tpu_custom_call.1} parent=23 // pred_fallthru
          _
      $region24: #{tpu_custom_call.1} parent=5 // pred_fallthru
        _
      %p212 = scmp.le.s32.totalorder 2, %s13
      // Predicated region
      $region33: #{tpu_custom_call.1} parent=5 // pred_check
        %p213 = pneg %p212
      $region34: #{tpu_custom_call.1} parent=5 // pred_check_branch
        %215 = sbr.rel (%p213) target = $region36
      $region35: #{tpu_custom_call.1} parent=5 // pred_region
        %s216 = ssub.s32 %s13, 2
        // Predicated region
        $region37: #{tpu_custom_call.1} parent=35 // pred_check
          %p217 = pneg %p68
        $region38: #{tpu_custom_call.1} parent=35 // pred_check_branch
          %219 = sbr.rel (%p217) target = $region40
        $region39: #{tpu_custom_call.1} parent=35 // pred_region
          %s220 = sand.u32 %s53, 1
          %s221 = scalar_lea.sflag [#allocation4], %s220
          %s222 = sand.u32 %s53, 1
          %s223 = smul.addr %s222, 16
          %s224 = scalar_lea.vmem [#allocation5], %s223
          %225 = dma.done %s221, 256
        $region40: #{tpu_custom_call.1} parent=35 // pred_fallthru
          _
      $region36: #{tpu_custom_call.1} parent=5 // pred_fallthru
        _
    $region6: #{tpu_custom_call.1} parent=1 // loop_footer
      %s17 = sadd.s32 1, %s13
    $region7: #{tpu_custom_call.1} parent=1 // loop_footer_branch
      %12 = sbr.rel target = $region3
    $region8: #{tpu_custom_call.1} parent=1 // loop_exit
      _
    %226 = vsyncpa [#allocation3], 1
    %s227 = scalar_lea.sflag [#allocation3], 1
    %228 = vsyncpa %s227, 1
    %229 = vsyncpa [#allocation4], 1
    %s230 = scalar_lea.sflag [#allocation4], 1
    %231 = vsyncpa %s230, 1

</llo_original>
